<compile_context>
chip_gen: v7x
topology: tpu7x:2x2x1
jax: 0.10.0
libtpu: 0.0.40
codegen_flags: <defaults>
</compile_context>

<pallas_src>
import jax
import jax.numpy as jnp
from jax.experimental import pallas as pl
from jax.experimental.pallas import tpu as pltpu


def _upsample_kernel(x_ref, g_ref, o_ref):
    # x_ref: (TM, k*W)        TM folded rows, each holding k contiguous image rows
    # g_ref: (k*W, k*s*s*W)   block-diagonal 0/1 replication matrix (grid-invariant)
    # o_ref: (TM, k*s*s*W)    folded row r = the k*s upsampled output rows of row r
    o_ref[...] = jnp.dot(
        x_ref[...], g_ref[...], preferred_element_type=jnp.float32
    ).astype(o_ref.dtype)


def _is_v5e():
    try:
        kind = jax.devices()[0].device_kind.lower()
    except Exception:
        return False
    return ("v5 lite" in kind) or ("v5e" in kind) or ("v5litepod" in kind)


def _vmem_budgets():
    """(total block-VMEM budget, vmem_limit_bytes), generation-aware."""
    try:
        cap = int(getattr(pltpu.get_tpu_info(), "vmem_capacity_bytes", 0) or 0)
    except Exception:
        cap = 0
    if cap >= 100 * 1024 * 1024:            # v5e / v6e: 128 MiB physical VMEM
        return 32 * 1024 * 1024, 80 * 1024 * 1024
    # v7x (64 MiB per TensorCore) or unknown: stay conservative
    return 14 * 1024 * 1024, 40 * 1024 * 1024


def _choose_fold(n_flat_rows, w, s, k_cap):
    """Largest k <= k_cap dividing the flat row count; prefer k whose output row
    width k*s*s*w is a multiple of 128 lanes (fully unmasked stores)."""
    best_k, best_mult = 1, (s * s * w) % 128 == 0
    for k in range(2, min(k_cap, n_flat_rows) + 1):
        if n_flat_rows % k:
            continue
        mult = (k * s * s * w) % 128 == 0
        if (mult and not best_mult) or (mult == best_mult and k > best_k):
            best_k, best_mult = k, mult
    return best_k


def _choose_tile_rows(n_rows, bytes_per_row, total_budget):
    """Row tile (multiple of 8, or the full extent).

    Bigger blocks amortize the ~0.35us/step overhead and approach the HBM
    roofline; but large inputs also want >= ~8 grid steps (software pipelining
    and >= 4 steps per TensorCore when v7x shards the "parallel" axis), and tiny
    inputs should not be split at all (per-step floor ~1 MiB)."""
    min_step_bytes = 1 << 20
    total_bytes = n_rows * bytes_per_row
    if n_rows <= 16 or total_bytes < 2 * min_step_bytes:
        return n_rows                                     # single full-extent block
    tm_budget = max(8, (total_budget // bytes_per_row) // 8 * 8)
    tm_steps = max(8, (pl.cdiv(n_rows, 8) + 7) // 8 * 8)  # aim for ~8 grid steps
    tm_min = max(8, (min_step_bytes // bytes_per_row) // 8 * 8)
    tm = min(tm_budget, max(tm_steps, tm_min))
    return min(tm, n_rows)


def upsample_nearest(x, scale_factor):
    """Nearest-neighbor upsample of an NCHW tensor by an integer scale factor."""
    s_f = float(scale_factor)
    s = int(round(s_f))
    # TODO(synk): non-integer and per-axis (tuple) scale factors that PyTorch's
    # Upsample accepts need a general nearest index map; not supported here.
    assert abs(s_f - s) < 1e-9 and s >= 1, "only integer scale factors are supported"

    N, C, H, W = x.shape
    Ho, Wo = H * s, W * s
    if s == 1:
        return x

    # Integer (and other exotic) dtypes: the f32-accumulate + cast path is not
    # value-faithful for them; use a plain replication fallback instead.
    if not (jnp.issubdtype(x.dtype, jnp.floating) and x.dtype.itemsize in (2, 4)):
        return jnp.repeat(jnp.repeat(x, s, axis=2), s, axis=3)

    # bf16/f16 inputs keep their dtype for G (exact 0/1 selection under f32
    # accumulation; avoids the decomposed f32 MXU path); f32 is never downcast.
    g_dtype = x.dtype if x.dtype.itemsize == 2 else jnp.float32

    n_flat = N * C * H

    # Row-folding factor: contraction K = k*W near 128, output rows lane-dense.
    k_cap = max(1, -(-128 // W))                 # ceil(128 / W)
    if g_dtype == jnp.float32 and _is_v5e():
        # v5e MXU is bf16/int-only; f32 matmuls are decomposed (3-6x MXU work):
        # keep the folded contraction small so the kernel stays HBM-bound.
        k_cap = min(k_cap, 2)
    k = _choose_fold(n_flat, W, s, k_cap)

    n_rows = n_flat // k
    kw = k * W
    out_cols = k * s * s * W

    # Block-diagonal replication matrix G_k = kron(I_k, g):
    #   column c selects input element (c // (s*s*W)) * W + (c % (s*W)) // s
    col = jnp.arange(out_cols)
    src = (col // (s * s * W)) * W + (col % (s * W)) // s
    g = (jnp.arange(kw)[:, None] == src[None, :]).astype(g_dtype)  # (k*W, k*s*s*W)

    x2 = x.reshape(n_rows, kw)  # free view: k contiguous image rows per matrix row

    itemsize = x.dtype.itemsize
    # double-buffered input + double-buffered output + f32 matmul intermediate
    bytes_per_row = 2 * kw * itemsize + 2 * out_cols * itemsize + out_cols * 4
    total_budget, vmem_limit = _vmem_budgets()
    tm = _choose_tile_rows(n_rows, bytes_per_row, total_budget)
    grid = (pl.cdiv(n_rows, tm),)

    cost = pl.CostEstimate(
        flops=int(2 * n_rows * kw * out_cols),
        transcendentals=0,
        bytes_accessed=int((1 + s * s) * x.size * itemsize
                           + g.size * jnp.dtype(g_dtype).itemsize),
    )

    out2 = pl.pallas_call(
        _upsample_kernel,
        out_shape=jax.ShapeDtypeStruct((n_rows, out_cols), x.dtype),
        grid_spec=pltpu.PrefetchScalarGridSpec(
            num_scalar_prefetch=0,
            grid=grid,
            in_specs=[
                pl.BlockSpec((tm, kw), lambda i: (i, 0)),
                # constant block index -> G is DMA'd into VMEM once, not per step
                pl.BlockSpec((kw, out_cols), lambda i: (0, 0)),
            ],
            out_specs=pl.BlockSpec((tm, out_cols), lambda i: (i, 0)),
        ),
        compiler_params=pltpu.CompilerParams(
            dimension_semantics=("parallel",),
            vmem_limit_bytes=vmem_limit,
        ),
        cost_estimate=cost,
    )(x2, g)

    # (N*C*H/k, k*s*s*W) -> (N, C, H*s, W*s) is a free row-major reshape.
    return out2.reshape(N, C, Ho, Wo)


class Upsample:
    """JAX/Pallas equivalent of the PyTorch Upsample module (nearest mode)."""

    def __init__(self, scale_factor, mode="nearest"):
        assert mode == "nearest", "only nearest mode is implemented"
        self.scale_factor = scale_factor
        self.mode = mode

    def __call__(self, x):
        return upsample_nearest(x, self.scale_factor)


if __name__ == "__main__":
    key = jax.random.PRNGKey(0)
    key, k2 = jax.random.split(key)
    N, C, H, W = 2, 4, 16, 16
    scale = 2
    x = jax.random.normal(key, (N, C, H, W), dtype=jnp.float32)

    model = Upsample(scale_factor=scale, mode="nearest")
    out = jax.block_until_ready(model(x))

    # Reference: plain-JAX nearest upsample (same semantics as F.interpolate nearest).
    ref = jnp.repeat(jnp.repeat(x, scale, axis=2), scale, axis=3)
    assert out.shape == (N, C, H * scale, W * scale), out.shape
    assert out.dtype == x.dtype
    assert jnp.allclose(out, ref), "mismatch vs reference nearest upsample (f32)"

    # bf16 path (G stays bf16; f32 accumulation -> exact selection).
    xb = x.astype(jnp.bfloat16)
    outb = jax.block_until_ready(model(xb))
    refb = jnp.repeat(jnp.repeat(xb, scale, axis=2), scale, axis=3)
    assert outb.dtype == jnp.bfloat16
    assert jnp.allclose(outb.astype(jnp.float32), refb.astype(jnp.float32), atol=1e-2), \
        "mismatch vs reference nearest upsample (bf16)"

    # YOLO-style odd spatial grid (13x13): exercises folding where neither k*W
    # nor k*s*s*W is a multiple of 128 and the fold crosses image-row boundaries.
    x13 = jax.random.normal(k2, (2, 4, 13, 13), dtype=jnp.float32)
    out13 = jax.block_until_ready(model(x13))
    ref13 = jnp.repeat(jnp.repeat(x13, scale, axis=2), scale, axis=3)
    assert out13.shape == (2, 4, 26, 26)
    assert jnp.allclose(out13, ref13), "mismatch vs reference nearest upsample (13x13)"

    print("KERNEL_OK")
</pallas_src>

<mosaic_0001>
module attributes {stable_mosaic.version = 11 : i64} {
  func.func @_upsample_kernel(%arg0: i32, %arg1: memref<16x128xf32, #tpu.memory_space<vmem>>, %arg2: memref<128x512xf32, #tpu.memory_space<vmem>>, %arg3: memref<16x512xf32, #tpu.memory_space<vmem>>) attributes {dimension_semantics = [#tpu.dimension_semantics<parallel>], iteration_bounds = array<i64: 1>, scalar_prefetch = 0 : i64, scratch_operands = 0 : i64, tpu.core_type = #tpu.core_type<tc>, window_params = [{transform_indices = @transform_0, window_bounds = array<i64: 16, 128>}, {pipeline_mode = #tpu.pipeline_mode<synchronous>, transform_indices = @transform_1, window_bounds = array<i64: 128, 512>}, {transform_indices = @transform_2, window_bounds = array<i64: 16, 512>}]} {
    %c0 = arith.constant 0 : index
    %c0_0 = arith.constant 0 : index
    %0 = vector.load %arg1[%c0, %c0_0] : memref<16x128xf32, #tpu.memory_space<vmem>>, vector<16x128xf32>
    %c0_1 = arith.constant 0 : index
    %c0_2 = arith.constant 0 : index
    %1 = vector.load %arg2[%c0_1, %c0_2] : memref<128x512xf32, #tpu.memory_space<vmem>>, vector<128x512xf32>
    %cst = arith.constant dense<0.000000e+00> : vector<16x512xf32>
    %2 = tpu.matmul %0, %1, %cst {dimension_numbers = #tpu.dot_dimension_numbers<[1], [0], [0], [1], [0, 0, 1, 1], [], []>} : vector<16x128xf32>, vector<128x512xf32>, vector<16x512xf32> -> vector<16x512xf32>
    %c0_3 = arith.constant 0 : index
    %c0_4 = arith.constant 0 : index
    %3 = vector.load %arg3[%c0_3, %c0_4] : memref<16x512xf32, #tpu.memory_space<vmem>>, vector<16x512xf32>
    tpu.vector_store %arg3[%c0_3, %c0_4], %2 {strides = array<i32>} : memref<16x512xf32, #tpu.memory_space<vmem>>, vector<16x512xf32>,
    return
  }
  func.func @transform_0(%arg0: i32) -> (i32, i32) {
    %c0_i32 = arith.constant 0 : i32
    %c0_i32_0 = arith.constant 0 : i32
    return %arg0, %c0_i32 : i32, i32
  }
  func.func @transform_1(%arg0: i32) -> (i32, i32) {
    %c0_i32 = arith.constant 0 : i32
    %c0_i32_0 = arith.constant 0 : i32
    %c0_i32_1 = arith.constant 0 : i32
    return %c0_i32, %c0_i32_0 : i32, i32
  }
  func.func @transform_2(%arg0: i32) -> (i32, i32) {
    %c0_i32 = arith.constant 0 : i32
    %c0_i32_0 = arith.constant 0 : i32
    return %arg0, %c0_i32 : i32, i32
  }
}

</mosaic_0001>

<llo_original>
// kernel: tpu_custom_call.1
$region0: #{tpu_custom_call.1}
  #allocation0 [shape = 'u32[]', space=smem, size = 0x4, offset = 0x4, fixed_abs, tag = 'smem constant byte address 0x4 - core index']
  #allocation1 [shape = 'u32[144,128]{1,0:T(1,128)}', space=vmem, size = 0x12000, scoped, tag = 'internal scratch']
  %s0 = inlined_call_operand.hbm [shape: f32[16,128], index: 0, kind: input, shape index: {}]
  %s1 = inlined_call_operand.hbm [shape: f32[128,512], index: 1, kind: input, shape index: {}]
  %s2 = inlined_call_operand.hbm [shape: f32[16,512], index: 2, kind: output, shape index: {}]
  %s3 = sld [smem:[#allocation0]]
  $region26: #{tpu_custom_call.1} parent=0
    _
  %s5 = ssub.s32 1, %s3
  %s6 = scalar_select 0, %s5, %s3
  $region1: #{tpu_custom_call.1} parent=0
    #allocation2 [shape = 'u8[8192]{0}', space=vmem, size = 0x2000, scoped, tag = 'input window, operand 0, single buffered']
    #allocation3 [shape = 's32[1]{0}', space=sflag, size = 0x4, scoped, tag = 'scoped memory for tpu_custom_call.1']
    #allocation4 [shape = 's32[1]{0}', space=sflag, size = 0x4, scoped, tag = 'scoped memory for tpu_custom_call.1']
    #allocation5 [shape = 'u8[262144]{0}', space=vmem, size = 0x40000, scoped, tag = 'input window, operand 1, single buffered']
    #allocation6 [shape = 's32[1]{0}', space=sflag, size = 0x4, scoped, tag = 'scoped memory for tpu_custom_call.1']
    #allocation7 [shape = 'u8[32768]{0}', space=vmem, size = 0x8000, scoped, tag = 'output window, operand 0, single buffered']
    %7 = vsyncpa [#allocation3], 0
    %8 = vsyncpa [#allocation6], 0
    %9 = vsyncpa [#allocation4], 0
    // Predicated region
    $region2: #{tpu_custom_call.1} parent=1 // pred_check
      _
    $region3: #{tpu_custom_call.1} parent=1 // pred_check_branch
      %11 = sbr.rel (0) target = $region5
    $region4: #{tpu_custom_call.1} parent=1 // pred_region
      %s13 = ssub.s32 256, 256
      %14 = vsyncadd [#allocation3], %s13
      %s15 = sshll.u32 [#allocation2], 4
      %s16 = int_to_ptr.vmem [resolvable:$true] %s15
      %21 = dma.hbm_to_vmem [thread:$0]  %s0, 256, %s16, [#allocation3], 128, 128, 8
    $region5: #{tpu_custom_call.1} parent=1 // pred_fallthru
      _
    // Predicated region
    $region6: #{tpu_custom_call.1} parent=1 // pred_check
      _
    $region7: #{tpu_custom_call.1} parent=1 // pred_check_branch
      %23 = sbr.rel (0) target = $region9
    $region8: #{tpu_custom_call.1} parent=1 // pred_region
      %s25 = ssub.s32 8192, 8192
      %26 = vsyncadd [#allocation6], %s25
      %s27 = sshll.u32 [#allocation5], 4
      %s28 = int_to_ptr.vmem [resolvable:$true] %s27
      %33 = dma.hbm_to_vmem [thread:$0]  %s1, 8192, %s28, [#allocation6], 512, 512, 32
    $region9: #{tpu_custom_call.1} parent=1 // pred_fallthru
      _
    // Predicated region
    $region10: #{tpu_custom_call.1} parent=1 // pred_check
      _
    $region11: #{tpu_custom_call.1} parent=1 // pred_check_branch
      %35 = sbr.rel (0) target = $region13
    $region12: #{tpu_custom_call.1} parent=1 // pred_region
      %36 = dma.done [#allocation3], 256
    $region13: #{tpu_custom_call.1} parent=1 // pred_fallthru
      _
    // Predicated region
    $region14: #{tpu_custom_call.1} parent=1 // pred_check
      _
    $region15: #{tpu_custom_call.1} parent=1 // pred_check_branch
      %38 = sbr.rel (0) target = $region17
    $region16: #{tpu_custom_call.1} parent=1 // pred_region
      %39 = dma.done [#allocation6], 8192
    $region17: #{tpu_custom_call.1} parent=1 // pred_fallthru
      _
    %v40 = vld [vmem:[#allocation2] sm:$0xff]
    %v41 = vld [vmem:[#allocation2 + $0x8] sm:$0xff]
    %v42 = vld [vmem:[#allocation5] sm:$0xff]
    %v43 = vld [vmem:[#allocation5 + $0x8] sm:$0xff]
    %v44 = vld [vmem:[#allocation5 + $0x10] sm:$0xff]
    %v45 = vld [vmem:[#allocation5 + $0x18] sm:$0xff]
    %v46 = vld [vmem:[#allocation5 + $0x20] sm:$0xff]
    %v47 = vld [vmem:[#allocation5 + $0x28] sm:$0xff]
    %v48 = vld [vmem:[#allocation5 + $0x30] sm:$0xff]
    %v49 = vld [vmem:[#allocation5 + $0x38] sm:$0xff]
    %v50 = vld [vmem:[#allocation5 + $0x40] sm:$0xff]
    %v51 = vld [vmem:[#allocation5 + $0x48] sm:$0xff]
    %v52 = vld [vmem:[#allocation5 + $0x50] sm:$0xff]
    %v53 = vld [vmem:[#allocation5 + $0x58] sm:$0xff]
    %v54 = vld [vmem:[#allocation5 + $0x60] sm:$0xff]
    %v55 = vld [vmem:[#allocation5 + $0x68] sm:$0xff]
    %v56 = vld [vmem:[#allocation5 + $0x70] sm:$0xff]
    %v57 = vld [vmem:[#allocation5 + $0x78] sm:$0xff]
    %v58 = vld [vmem:[#allocation5 + $0x80] sm:$0xff]
    %v59 = vld [vmem:[#allocation5 + $0x88] sm:$0xff]
    %v60 = vld [vmem:[#allocation5 + $0x90] sm:$0xff]
    %v61 = vld [vmem:[#allocation5 + $0x98] sm:$0xff]
    %v62 = vld [vmem:[#allocation5 + $0xa0] sm:$0xff]
    %v63 = vld [vmem:[#allocation5 + $0xa8] sm:$0xff]
    %v64 = vld [vmem:[#allocation5 + $0xb0] sm:$0xff]
    %v65 = vld [vmem:[#allocation5 + $0xb8] sm:$0xff]
    %v66 = vld [vmem:[#allocation5 + $0xc0] sm:$0xff]
    %v67 = vld [vmem:[#allocation5 + $0xc8] sm:$0xff]
    %v68 = vld [vmem:[#allocation5 + $0xd0] sm:$0xff]
    %v69 = vld [vmem:[#allocation5 + $0xd8] sm:$0xff]
    %v70 = vld [vmem:[#allocation5 + $0xe0] sm:$0xff]
    %v71 = vld [vmem:[#allocation5 + $0xe8] sm:$0xff]
    %v72 = vld [vmem:[#allocation5 + $0xf0] sm:$0xff]
    %v73 = vld [vmem:[#allocation5 + $0xf8] sm:$0xff]
    %v74 = vld [vmem:[#allocation5 + $0x100] sm:$0xff]
    %v75 = vld [vmem:[#allocation5 + $0x108] sm:$0xff]
    %v76 = vld [vmem:[#allocation5 + $0x110] sm:$0xff]
    %v77 = vld [vmem:[#allocation5 + $0x118] sm:$0xff]
    %v78 = vld [vmem:[#allocation5 + $0x120] sm:$0xff]
    %v79 = vld [vmem:[#allocation5 + $0x128] sm:$0xff]
    %v80 = vld [vmem:[#allocation5 + $0x130] sm:$0xff]
    %v81 = vld [vmem:[#allocation5 + $0x138] sm:$0xff]
    %v82 = vld [vmem:[#allocation5 + $0x140] sm:$0xff]
    %v83 = vld [vmem:[#allocation5 + $0x148] sm:$0xff]
    %v84 = vld [vmem:[#allocation5 + $0x150] sm:$0xff]
    %v85 = vld [vmem:[#allocation5 + $0x158] sm:$0xff]
    %v86 = vld [vmem:[#allocation5 + $0x160] sm:$0xff]
    %v87 = vld [vmem:[#allocation5 + $0x168] sm:$0xff]
    %v88 = vld [vmem:[#allocation5 + $0x170] sm:$0xff]
    %v89 = vld [vmem:[#allocation5 + $0x178] sm:$0xff]
    %v90 = vld [vmem:[#allocation5 + $0x180] sm:$0xff]
    %v91 = vld [vmem:[#allocation5 + $0x188] sm:$0xff]
    %v92 = vld [vmem:[#allocation5 + $0x190] sm:$0xff]
    %v93 = vld [vmem:[#allocation5 + $0x198] sm:$0xff]
    %v94 = vld [vmem:[#allocation5 + $0x1a0] sm:$0xff]
    %v95 = vld [vmem:[#allocation5 + $0x1a8] sm:$0xff]
    %v96 = vld [vmem:[#allocation5 + $0x1b0] sm:$0xff]
    %v97 = vld [vmem:[#allocation5 + $0x1b8] sm:$0xff]
    %v98 = vld [vmem:[#allocation5 + $0x1c0] sm:$0xff]
    %v99 = vld [vmem:[#allocation5 + $0x1c8] sm:$0xff]
    %v100 = vld [vmem:[#allocation5 + $0x1d0] sm:$0xff]
    %v101 = vld [vmem:[#allocation5 + $0x1d8] sm:$0xff]
    %v102 = vld [vmem:[#allocation5 + $0x1e0] sm:$0xff]
    %v103 = vld [vmem:[#allocation5 + $0x1e8] sm:$0xff]
    %v104 = vld [vmem:[#allocation5 + $0x1f0] sm:$0xff]
    %v105 = vld [vmem:[#allocation5 + $0x1f8] sm:$0xff]
    %106 = vmatprep.subr.mxu0 %v43
    %107 = vmatpush1.msra.mxu0 %v42
    %108 = vmatprep.subr.mxu0 %v47
    %109 = vmatpush1.msra.mxu0 %v46
    %110 = vmatprep.subr.mxu0 %v51
    %111 = vmatpush1.msra.mxu0 %v50
    %112 = vmatprep.subr.mxu0 %v55
    %113 = vmatpush1.msra.mxu0 %v54
    %114 = vmatprep.subr.mxu0 %v59
    %115 = vmatpush1.msra.mxu0 %v58
    %116 = vmatprep.subr.mxu0 %v63
    %117 = vmatpush1.msra.mxu0 %v62
    %118 = vmatprep.subr.mxu0 %v67
    %119 = vmatpush1.msra.mxu0 %v66
    %120 = vmatprep.subr.mxu0 %v71
    %121 = vmatpush1.msra.mxu0 %v70
    %122 = vmatprep.subr.mxu0 %v75
    %123 = vmatpush1.msra.mxu0 %v74
    %124 = vmatprep.subr.mxu0 %v79
    %125 = vmatpush1.msra.mxu0 %v78
    %126 = vmatprep.subr.mxu0 %v83
    %127 = vmatpush1.msra.mxu0 %v82
    %128 = vmatprep.subr.mxu0 %v87
    %129 = vmatpush1.msra.mxu0 %v86
    %130 = vmatprep.subr.mxu0 %v91
    %131 = vmatpush1.msra.mxu0 %v90
    %132 = vmatprep.subr.mxu0 %v95
    %133 = vmatpush1.msra.mxu0 %v94
    %134 = vmatprep.subr.mxu0 %v99
    %135 = vmatpush1.msra.mxu0 %v98
    %136 = vmatprep.subr.mxu0 %v103
    %137 = vmatpush1.msra.mxu0 %v102
    %138 = vmatprep.subr.mxu0 0.0
    %139 = vmatpush1.msra.mxu0 0.0
    %140 = vmatprep.subr.mxu0 0.0
    %141 = vmatpush1.msra.mxu0 0.0
    %142 = vmatprep.subr.mxu0 0.0
    %143 = vmatpush1.msra.mxu0 0.0
    %144 = vmatprep.subr.mxu0 0.0
    %145 = vmatpush1.msra.mxu0 0.0
    %146 = vmatprep.subr.mxu0 0.0
    %147 = vmatpush1.msra.mxu0 0.0
    %148 = vmatprep.subr.mxu0 0.0
    %149 = vmatpush1.msra.mxu0 0.0
    %150 = vmatprep.subr.mxu0 0.0
    %151 = vmatpush1.msra.mxu0 0.0
    %152 = vmatprep.subr.mxu0 0.0
    %153 = vmatpush1.msra.mxu0 0.0
    %154 = vmatprep.subr.mxu0 0.0
    %155 = vmatpush1.msra.mxu0 0.0
    %156 = vmatprep.subr.mxu0 0.0
    %157 = vmatpush1.msra.mxu0 0.0
    %158 = vmatprep.subr.mxu0 0.0
    %159 = vmatpush1.msra.mxu0 0.0
    %160 = vmatprep.subr.mxu0 0.0
    %161 = vmatpush1.msra.mxu0 0.0
    %162 = vmatprep.subr.mxu0 0.0
    %163 = vmatpush1.msra.mxu0 0.0
    %164 = vmatprep.subr.mxu0 0.0
    %165 = vmatpush1.msra.mxu0 0.0
    %166 = vmatprep.subr.mxu0 0.0
    %167 = vmatpush1.msra.mxu0 0.0
    %168 = vmatprep.subr.mxu0 0.0
    %169 = vmatpush1.msra.mxu0 0.0
    %170 = vmatprep.mubr.f32.mxu0 0.0
    %171 = vmatmul.mubr.f32.gmra.mrb[0].mxu0 %v40
    %v172 = vpop.f32.mrb[0].mxu0
    %v173 = vadd.f32 0.0, %v172
    %v174 = vpop.f32.mrb[0].mxu0
    %v175 = vadd.f32 0.0, %v174
    %176 = vmatprep.mubr.f32.mxu0 0.0
    %177 = vmatmul.mubr.f32.gmra.mrb[0].mxu0 %v41
    %v178 = vpop.f32.mrb[0].mxu0
    %v179 = vadd.f32 0.0, %v178
    %v180 = vpop.f32.mrb[0].mxu0
    %v181 = vadd.f32 0.0, %v180
    %182 = vdwg.mxu0
    %183 = vmatprep.subr.mxu0 %v45
    %184 = vmatpush1.msra.mxu0 %v44
    %185 = vmatprep.subr.mxu0 %v49
    %186 = vmatpush1.msra.mxu0 %v48
    %187 = vmatprep.subr.mxu0 %v53
    %188 = vmatpush1.msra.mxu0 %v52
    %189 = vmatprep.subr.mxu0 %v57
    %190 = vmatpush1.msra.mxu0 %v56
    %191 = vmatprep.subr.mxu0 %v61
    %192 = vmatpush1.msra.mxu0 %v60
    %193 = vmatprep.subr.mxu0 %v65
    %194 = vmatpush1.msra.mxu0 %v64
    %195 = vmatprep.subr.mxu0 %v69
    %196 = vmatpush1.msra.mxu0 %v68
    %197 = vmatprep.subr.mxu0 %v73
    %198 = vmatpush1.msra.mxu0 %v72
    %199 = vmatprep.subr.mxu0 %v77
    %200 = vmatpush1.msra.mxu0 %v76
    %201 = vmatprep.subr.mxu0 %v81
    %202 = vmatpush1.msra.mxu0 %v80
    %203 = vmatprep.subr.mxu0 %v85
    %204 = vmatpush1.msra.mxu0 %v84
    %205 = vmatprep.subr.mxu0 %v89
    %206 = vmatpush1.msra.mxu0 %v88
    %207 = vmatprep.subr.mxu0 %v93
    %208 = vmatpush1.msra.mxu0 %v92
    %209 = vmatprep.subr.mxu0 %v97
    %210 = vmatpush1.msra.mxu0 %v96
    %211 = vmatprep.subr.mxu0 %v101
    %212 = vmatpush1.msra.mxu0 %v100
    %213 = vmatprep.subr.mxu0 %v105
    %214 = vmatpush1.msra.mxu0 %v104
    %215 = vmatprep.subr.mxu0 0.0
    %216 = vmatpush1.msra.mxu0 0.0
    %217 = vmatprep.subr.mxu0 0.0
    %218 = vmatpush1.msra.mxu0 0.0
    %219 = vmatprep.subr.mxu0 0.0
    %220 = vmatpush1.msra.mxu0 0.0
    %221 = vmatprep.subr.mxu0 0.0
    %222 = vmatpush1.msra.mxu0 0.0
    %223 = vmatprep.subr.mxu0 0.0
    %224 = vmatpush1.msra.mxu0 0.0
    %225 = vmatprep.subr.mxu0 0.0
    %226 = vmatpush1.msra.mxu0 0.0
    %227 = vmatprep.subr.mxu0 0.0
    %228 = vmatpush1.msra.mxu0 0.0
    %229 = vmatprep.subr.mxu0 0.0
    %230 = vmatpush1.msra.mxu0 0.0
    %231 = vmatprep.subr.mxu0 0.0
    %232 = vmatpush1.msra.mxu0 0.0
    %233 = vmatprep.subr.mxu0 0.0
    %234 = vmatpush1.msra.mxu0 0.0
    %235 = vmatprep.subr.mxu0 0.0
    %236 = vmatpush1.msra.mxu0 0.0
    %237 = vmatprep.subr.mxu0 0.0
    %238 = vmatpush1.msra.mxu0 0.0
    %239 = vmatprep.subr.mxu0 0.0
    %240 = vmatpush1.msra.mxu0 0.0
    %241 = vmatprep.subr.mxu0 0.0
    %242 = vmatpush1.msra.mxu0 0.0
    %243 = vmatprep.subr.mxu0 0.0
    %244 = vmatpush1.msra.mxu0 0.0
    %245 = vmatprep.subr.mxu0 0.0
    %246 = vmatpush1.msra.mxu0 0.0
    %247 = vmatprep.mubr.f32.mxu0 0.0
    %248 = vmatmul.mubr.f32.gmra.mrb[0].mxu0 %v40
    %v249 = vpop.f32.mrb[0].mxu0
    %v250 = vadd.f32 0.0, %v249
    %v251 = vpop.f32.mrb[0].mxu0
    %v252 = vadd.f32 0.0, %v251
    %253 = vmatprep.mubr.f32.mxu0 0.0
    %254 = vmatmul.mubr.f32.gmra.mrb[0].mxu0 %v41
    %v255 = vpop.f32.mrb[0].mxu0
    %v256 = vadd.f32 0.0, %v255
    %v257 = vpop.f32.mrb[0].mxu0
    %v258 = vadd.f32 0.0, %v257
    %259 = vdwg.mxu0
    %260 = vst [vmem:[#allocation7] sm:$0xff] %v173
    %261 = vst [vmem:[#allocation7 + $0x8] sm:$0xff] %v175
    %262 = vst [vmem:[#allocation7 + $0x10] sm:$0xff] %v250
    %263 = vst [vmem:[#allocation7 + $0x18] sm:$0xff] %v252
    %264 = vst [vmem:[#allocation7 + $0x20] sm:$0xff] %v179
    %265 = vst [vmem:[#allocation7 + $0x28] sm:$0xff] %v181
    %266 = vst [vmem:[#allocation7 + $0x30] sm:$0xff] %v256
    %267 = vst [vmem:[#allocation7 + $0x38] sm:$0xff] %v258
    // Predicated region
    $region18: #{tpu_custom_call.1} parent=1 // pred_check
      _
    $region19: #{tpu_custom_call.1} parent=1 // pred_check_branch
      %269 = sbr.rel (0) target = $region21
    $region20: #{tpu_custom_call.1} parent=1 // pred_region
      %s271 = ssub.s32 1024, 1024
      %272 = vsyncadd [#allocation4], %s271
      %s273 = sshll.u32 [#allocation7], 4
      %s274 = int_to_ptr.vmem [resolvable:$true] %s273
      %279 = dma.vmem_to_hbm [thread:$0]  %s274, 1024, %s2, [#allocation4], 512, 512, 32
    $region21: #{tpu_custom_call.1} parent=1 // pred_fallthru
      _
    // Predicated region
    $region22: #{tpu_custom_call.1} parent=1 // pred_check
      _
    $region23: #{tpu_custom_call.1} parent=1 // pred_check_branch
      %281 = sbr.rel (0) target = $region25
    $region24: #{tpu_custom_call.1} parent=1 // pred_region
      %282 = dma.done [#allocation4], 1024
    $region25: #{tpu_custom_call.1} parent=1 // pred_fallthru
      _
    %283 = vsyncpa [#allocation3], 1
    %284 = vsyncpa [#allocation6], 1
    %285 = vsyncpa [#allocation4], 1

</llo_original>
